<compile_context>
chip_gen: v7x
topology: tpu7x:2x2x1
jax: 0.10.0
libtpu: 0.0.40
codegen_flags: <defaults>
</compile_context>

<pallas_src>
import jax
import jax.numpy as jnp
from jax.experimental import pallas as pl
from jax.experimental.pallas import tpu as pltpu

HIDDEN = 16  # Attention(in_size, hidden_size=16)


def gat_kernel(x_ref, w1_ref, b1_ref, w2_ref, out_ref):
    """One (tile_n, nhid) row tile -> (tile_n, nheads) output tile.

    x_ref  : (tile_n, nhid)        input row tile (any float dtype)
    w1_ref : (nhid, nheads*16)     fused first-Linear weights (MXU dtype)
    b1_ref : (1, nheads*16)        fused first-Linear biases (f32)
    w2_ref : (nheads*16, nheads)   block-diagonal second projection (MXU dtype)
    out_ref: (tile_n, nheads)      column h holds head h's score (f32)
    """
    x = x_ref[...].astype(w1_ref.dtype)          # bf16 MXU operand (no-op if already)
    h = jnp.dot(x, w1_ref[...], preferred_element_type=jnp.float32)
    h = jnp.tanh(h + b1_ref[...])                # elementwise math in f32
    out = jnp.dot(h.astype(w2_ref.dtype), w2_ref[...],
                  preferred_element_type=jnp.float32)
    out_ref[...] = out.astype(out_ref.dtype)


def pack_gat_params(w1, b1, w2, mxu_dtype=jnp.bfloat16):
    """Pack per-head weights once (hoisted out of the forward call).

    w1: (nheads, nhid, 16)   b1: (nheads, 1, 16)   w2: (nheads, 1, 16)
    Returns (w1_all, b1_all, w2_bd).
    """
    nheads, nhid, hid = w1.shape
    fused = nheads * hid
    # W1_all: (nhid, nheads*16); columns [h*16:(h+1)*16] belong to head h.
    w1_all = jnp.transpose(w1, (1, 0, 2)).reshape(nhid, fused).astype(mxu_dtype)
    b1_all = b1.reshape(1, fused).astype(jnp.float32)
    # Block-diagonal second projection, built in f32 (vectorized, no scatter
    # loop), then cast explicitly to the MXU dtype.  Shape (fused, nheads):
    # w2_bd[h*hid + k, h] = w2[h, 0, k].
    w2_r = w2.reshape(nheads, hid).astype(jnp.float32)
    eye = jnp.eye(nheads, dtype=jnp.float32)
    w2_bd = (eye[:, None, :] * w2_r[:, :, None]).reshape(fused, nheads)
    w2_bd = w2_bd.astype(mxu_dtype)
    return w1_all, b1_all, w2_bd


def _round_up(a, m):
    return ((a + m - 1) // m) * m


def gat_forward(x, w1_all, b1_all, w2_bd, *, tile_n=4096):
    """x: (N, nhid); packed weights from pack_gat_params -> (N, nheads) f32."""
    N, nhid = x.shape
    fused = w1_all.shape[1]
    nheads = w2_bd.shape[1]
    assert b1_all.shape == (1, fused)
    assert w2_bd.shape == (fused, nheads)

    # Row-tile selection: multiple of 8 sublanes, no jnp.pad of x (Pallas
    # masks the ragged last block).  When N is large enough, cap the tile so
    # the grid has >= 2 steps (v7x: lets "parallel" shard across both TCs).
    n_rounded = _round_up(N, 8)
    tn = min(tile_n, n_rounded)
    if n_rounded >= 16:
        tn = min(tn, _round_up(pl.cdiv(n_rounded, 2), 8))
    tn = _round_up(tn, 8)
    n_tiles = pl.cdiv(N, tn)

    itemsize_x = jnp.dtype(x.dtype).itemsize
    itemsize_w = jnp.dtype(w1_all.dtype).itemsize
    cost = pl.CostEstimate(
        flops=2 * N * nhid * fused + 2 * N * fused * nheads,
        transcendentals=N * fused,
        bytes_accessed=(N * nhid * itemsize_x            # x read
                        + N * nheads * 4                 # output write (f32)
                        + (nhid * fused + fused * nheads) * itemsize_w
                        + fused * 4),                    # resident weights
    )

    out = pl.pallas_call(
        gat_kernel,
        out_shape=jax.ShapeDtypeStruct((N, nheads), jnp.float32),
        grid=(n_tiles,),
        in_specs=[
            pl.BlockSpec((tn, nhid), lambda i: (i, 0)),
            pl.BlockSpec((nhid, fused), lambda i: (0, 0)),
            pl.BlockSpec((1, fused), lambda i: (0, 0)),
            pl.BlockSpec((fused, nheads), lambda i: (0, 0)),
        ],
        out_specs=pl.BlockSpec((tn, nheads), lambda i: (i, 0)),
        compiler_params=pltpu.CompilerParams(
            dimension_semantics=("parallel",),
        ),
        cost_estimate=cost,
    )(x, w1_all, b1_all, w2_bd)
    return out


def gat_reference(x, w1, b1, w2):
    """Pure-JAX reference matching the PyTorch GAT forward (per-head loop)."""
    cols = []
    for h in range(w1.shape[0]):
        hidden = jnp.tanh(x @ w1[h] + b1[h])
        cols.append(jnp.sum(hidden * w2[h], axis=-1, keepdims=True))
    return jnp.concatenate(cols, axis=1)


def init_params(key, nhid, nheads, dtype=jnp.float32):
    """Deterministic synthetic weights (PyTorch-Linear-like uniform ranges)."""
    k1, k2, k3 = jax.random.split(key, 3)
    bound1 = 1.0 / jnp.sqrt(nhid)
    bound2 = 1.0 / jnp.sqrt(HIDDEN)
    # nn.Linear(nhid, 16): weight (16, nhid) -> stored transposed as (nhid, 16)
    w1 = jax.random.uniform(k1, (nheads, nhid, HIDDEN), dtype, -bound1, bound1)
    b1 = jax.random.uniform(k2, (nheads, 1, HIDDEN), dtype, -bound1, bound1)
    # nn.Linear(16, 1, bias=False): weight (1, 16)
    w2 = jax.random.uniform(k3, (nheads, 1, HIDDEN), dtype, -bound2, bound2)
    return w1, b1, w2


if __name__ == "__main__":
    nhid, nheads = 32, 4
    N = 8  # number of rows (e.g. fused views / nodes)

    key = jax.random.PRNGKey(0)
    kx, kp = jax.random.split(key)
    x = jax.random.normal(kx, (N, nhid), jnp.float32)
    w1, b1, w2 = init_params(kp, nhid, nheads)
    ref = gat_reference(x, w1, b1, w2)

    # 1) f32 MXU path: exact correctness check against the reference.
    packed_f32 = pack_gat_params(w1, b1, w2, mxu_dtype=jnp.float32)
    out_f32 = jax.block_until_ready(gat_forward(x, *packed_f32))
    assert out_f32.shape == (N, nheads), out_f32.shape
    assert jnp.allclose(out_f32, ref, atol=1e-5, rtol=1e-5), (
        f"max abs err {jnp.max(jnp.abs(out_f32 - ref))}"
    )

    # 2) Default bf16-MXU performance path (f32 accumulate / elementwise).
    packed_bf16 = pack_gat_params(w1, b1, w2)  # bf16 MXU operands
    out_bf16 = jax.block_until_ready(gat_forward(x, *packed_bf16))
    assert out_bf16.shape == (N, nheads), out_bf16.shape
    assert jnp.allclose(out_bf16, ref, atol=2e-2, rtol=2e-2), (
        f"max abs err {jnp.max(jnp.abs(out_bf16 - ref))}"
    )

    # 3) Ragged multi-tile grid (no jnp.pad of x, last block masked by Pallas).
    N2 = 20
    x2 = jax.random.normal(jax.random.PRNGKey(1), (N2, nhid), jnp.float32)
    out_ragged = jax.block_until_ready(
        gat_forward(x2, *packed_f32, tile_n=8))   # 3 tiles, last one ragged
    ref2 = gat_reference(x2, w1, b1, w2)
    assert out_ragged.shape == (N2, nheads), out_ragged.shape
    assert jnp.allclose(out_ragged, ref2, atol=1e-5, rtol=1e-5), (
        f"max abs err {jnp.max(jnp.abs(out_ragged - ref2))}"
    )

    print("KERNEL_OK")
</pallas_src>

<mosaic_0001>
module attributes {stable_mosaic.version = 11 : i64} {
  func.func @gat_kernel(%arg0: i32, %arg1: memref<8x32xf32, #tpu.memory_space<vmem>>, %arg2: memref<32x64xf32, #tpu.memory_space<vmem>>, %arg3: memref<1x64xf32, #tpu.memory_space<vmem>>, %arg4: memref<64x4xf32, #tpu.memory_space<vmem>>, %arg5: memref<8x4xf32, #tpu.memory_space<vmem>>) attributes {dimension_semantics = [#tpu.dimension_semantics<parallel>], iteration_bounds = array<i64: 1>, scalar_prefetch = 0 : i64, scratch_operands = 0 : i64, tpu.core_type = #tpu.core_type<tc>, window_params = [{transform_indices = @transform_0, window_bounds = array<i64: 8, 32>}, {pipeline_mode = #tpu.pipeline_mode<synchronous>, transform_indices = @transform_1, window_bounds = array<i64: 32, 64>}, {pipeline_mode = #tpu.pipeline_mode<synchronous>, transform_indices = @transform_2, window_bounds = array<i64: 1, 64>}, {pipeline_mode = #tpu.pipeline_mode<synchronous>, transform_indices = @transform_3, window_bounds = array<i64: 64, 4>}, {transform_indices = @transform_4, window_bounds = array<i64: 8, 4>}]} {
    %c0 = arith.constant 0 : index
    %c0_0 = arith.constant 0 : index
    %0 = vector.load %arg1[%c0, %c0_0] : memref<8x32xf32, #tpu.memory_space<vmem>>, vector<8x32xf32>
    %c0_1 = arith.constant 0 : index
    %c0_2 = arith.constant 0 : index
    %1 = vector.load %arg2[%c0_1, %c0_2] : memref<32x64xf32, #tpu.memory_space<vmem>>, vector<32x64xf32>
    %cst = arith.constant dense<0.000000e+00> : vector<8x64xf32>
    %2 = tpu.matmul %0, %1, %cst {dimension_numbers = #tpu.dot_dimension_numbers<[1], [0], [0], [1], [0, 0, 1, 1], [], []>} : vector<8x32xf32>, vector<32x64xf32>, vector<8x64xf32> -> vector<8x64xf32>
    %c0_3 = arith.constant 0 : index
    %c0_4 = arith.constant 0 : index
    %3 = vector.load %arg3[%c0_3, %c0_4] : memref<1x64xf32, #tpu.memory_space<vmem>>, vector<1x64xf32>
    %4 = vector.broadcast %3 : vector<1x64xf32> to vector<8x64xf32>
    %5 = arith.addf %2, %4 : vector<8x64xf32>
    %6 = math.tanh %5 : vector<8x64xf32>
    %c0_5 = arith.constant 0 : index
    %c0_6 = arith.constant 0 : index
    %7 = vector.load %arg4[%c0_5, %c0_6] : memref<64x4xf32, #tpu.memory_space<vmem>>, vector<64x4xf32>
    %cst_7 = arith.constant dense<0.000000e+00> : vector<8x4xf32>
    %8 = tpu.matmul %6, %7, %cst_7 {dimension_numbers = #tpu.dot_dimension_numbers<[1], [0], [0], [1], [0, 0, 1, 1], [], []>} : vector<8x64xf32>, vector<64x4xf32>, vector<8x4xf32> -> vector<8x4xf32>
    %c0_8 = arith.constant 0 : index
    %c0_9 = arith.constant 0 : index
    %9 = vector.load %arg5[%c0_8, %c0_9] : memref<8x4xf32, #tpu.memory_space<vmem>>, vector<8x4xf32>
    tpu.vector_store %arg5[%c0_8, %c0_9], %8 {strides = array<i32>} : memref<8x4xf32, #tpu.memory_space<vmem>>, vector<8x4xf32>,
    return
  }
  func.func @transform_0(%arg0: i32) -> (i32, i32) {
    %c0_i32 = arith.constant 0 : i32
    %c0_i32_0 = arith.constant 0 : i32
    return %arg0, %c0_i32 : i32, i32
  }
  func.func @transform_1(%arg0: i32) -> (i32, i32) {
    %c0_i32 = arith.constant 0 : i32
    %c0_i32_0 = arith.constant 0 : i32
    %c0_i32_1 = arith.constant 0 : i32
    return %c0_i32, %c0_i32_0 : i32, i32
  }
  func.func @transform_2(%arg0: i32) -> (i32, i32) {
    %c0_i32 = arith.constant 0 : i32
    %c0_i32_0 = arith.constant 0 : i32
    %c0_i32_1 = arith.constant 0 : i32
    return %c0_i32, %c0_i32_0 : i32, i32
  }
  func.func @transform_3(%arg0: i32) -> (i32, i32) {
    %c0_i32 = arith.constant 0 : i32
    %c0_i32_0 = arith.constant 0 : i32
    %c0_i32_1 = arith.constant 0 : i32
    return %c0_i32, %c0_i32_0 : i32, i32
  }
  func.func @transform_4(%arg0: i32) -> (i32, i32) {
    %c0_i32 = arith.constant 0 : i32
    %c0_i32_0 = arith.constant 0 : i32
    return %arg0, %c0_i32 : i32, i32
  }
}

</mosaic_0001>

<llo_original>
// kernel: tpu_custom_call.1
$region0: #{tpu_custom_call.1}
  #allocation0 [shape = 'u32[]', space=smem, size = 0x4, offset = 0x4, fixed_abs, tag = 'smem constant byte address 0x4 - core index']
  #allocation1 [shape = 'u32[144,128]{1,0:T(1,128)}', space=vmem, size = 0x12000, scoped, tag = 'internal scratch']
  %s0 = inlined_call_operand.vmem [shape: f32[8,32], index: 0, kind: input, shape index: {}]
  %s1 = inlined_call_operand.vmem [shape: f32[32,64], index: 1, kind: input, shape index: {}]
  %s2 = inlined_call_operand.vmem [shape: f32[1,64], index: 2, kind: input, shape index: {}]
  %s3 = inlined_call_operand.vmem [shape: f32[64,4], index: 3, kind: input, shape index: {}]
  %s4 = inlined_call_operand.vmem [shape: f32[8,4], index: 4, kind: output, shape index: {}]
  %s5 = sld [smem:[#allocation0]]
  $region26: #{tpu_custom_call.1} parent=0
    _
  %s7 = ssub.s32 1, %s5
  %s8 = scalar_select 0, %s7, %s5
  // Predicated region
  $region2: #{tpu_custom_call.1} parent=0 // pred_check
    _
  $region3: #{tpu_custom_call.1} parent=0 // pred_check_branch
    %10 = sbr.rel (0) target = $region5
  $region4: #{tpu_custom_call.1} parent=0 // pred_region
    _
  $region5: #{tpu_custom_call.1} parent=0 // pred_fallthru
    _
  // Predicated region
  $region6: #{tpu_custom_call.1} parent=0 // pred_check
    _
  $region7: #{tpu_custom_call.1} parent=0 // pred_check_branch
    %12 = sbr.rel (0) target = $region9
  $region8: #{tpu_custom_call.1} parent=0 // pred_region
    _
  $region9: #{tpu_custom_call.1} parent=0 // pred_fallthru
    _
  // Predicated region
  $region10: #{tpu_custom_call.1} parent=0 // pred_check
    _
  $region11: #{tpu_custom_call.1} parent=0 // pred_check_branch
    %14 = sbr.rel (0) target = $region13
  $region12: #{tpu_custom_call.1} parent=0 // pred_region
    _
  $region13: #{tpu_custom_call.1} parent=0 // pred_fallthru
    _
  // Predicated region
  $region14: #{tpu_custom_call.1} parent=0 // pred_check
    _
  $region15: #{tpu_custom_call.1} parent=0 // pred_check_branch
    %16 = sbr.rel (0) target = $region17
  $region16: #{tpu_custom_call.1} parent=0 // pred_region
    _
  $region17: #{tpu_custom_call.1} parent=0 // pred_fallthru
    _
  %v17 = vld [vmem:[%s0] sm:$0xff]
  %v18 = vld [vmem:[%s1] sm:$0xff]
  %v19 = vld [vmem:[%s1 + $0x8] sm:$0xff]
  %v20 = vld [vmem:[%s1 + $0x10] sm:$0xff]
  %v21 = vld [vmem:[%s1 + $0x18] sm:$0xff]
  %v22 = vld [vmem:[%s2] sm:$0x1]
  %v24 = vlaneseq
  %v25 = vshrl.u32 %v24, 7
  %v26 = vsub.s32 0, %v25
  %v27 = vrot.slane %v22, %v26
  %vm29 = vcmask 261120
  %v31 = vsel %vm29, %v17, 0
  %33 = vmatprep.subr.mxu0 0.0
  %34 = vmatpush1.msra.mxu0 %v18
  %35 = vmatprep.subr.mxu0 0.0
  %36 = vmatpush1.msra.mxu0 %v19
  %37 = vmatprep.subr.mxu0 0.0
  %38 = vmatpush1.msra.mxu0 %v20
  %39 = vmatprep.subr.mxu0 0.0
  %40 = vmatpush1.msra.mxu0 %v21
  %41 = vmatprep.subr.mxu0 0.0
  %42 = vmatpush1.msra.mxu0 0.0
  %43 = vmatprep.subr.mxu0 0.0
  %44 = vmatpush1.msra.mxu0 0.0
  %45 = vmatprep.subr.mxu0 0.0
  %46 = vmatpush1.msra.mxu0 0.0
  %47 = vmatprep.subr.mxu0 0.0
  %48 = vmatpush1.msra.mxu0 0.0
  %49 = vmatprep.subr.mxu0 0.0
  %50 = vmatpush1.msra.mxu0 0.0
  %51 = vmatprep.subr.mxu0 0.0
  %52 = vmatpush1.msra.mxu0 0.0
  %53 = vmatprep.subr.mxu0 0.0
  %54 = vmatpush1.msra.mxu0 0.0
  %55 = vmatprep.subr.mxu0 0.0
  %56 = vmatpush1.msra.mxu0 0.0
  %57 = vmatprep.subr.mxu0 0.0
  %58 = vmatpush1.msra.mxu0 0.0
  %59 = vmatprep.subr.mxu0 0.0
  %60 = vmatpush1.msra.mxu0 0.0
  %61 = vmatprep.subr.mxu0 0.0
  %62 = vmatpush1.msra.mxu0 0.0
  %63 = vmatprep.subr.mxu0 0.0
  %64 = vmatpush1.msra.mxu0 0.0
  %65 = vmatprep.subr.mxu0 0.0
  %66 = vmatpush1.msra.mxu0 0.0
  %67 = vmatprep.subr.mxu0 0.0
  %68 = vmatpush1.msra.mxu0 0.0
  %69 = vmatprep.subr.mxu0 0.0
  %70 = vmatpush1.msra.mxu0 0.0
  %71 = vmatprep.subr.mxu0 0.0
  %72 = vmatpush1.msra.mxu0 0.0
  %73 = vmatprep.subr.mxu0 0.0
  %74 = vmatpush1.msra.mxu0 0.0
  %75 = vmatprep.subr.mxu0 0.0
  %76 = vmatpush1.msra.mxu0 0.0
  %77 = vmatprep.subr.mxu0 0.0
  %78 = vmatpush1.msra.mxu0 0.0
  %79 = vmatprep.subr.mxu0 0.0
  %80 = vmatpush1.msra.mxu0 0.0
  %81 = vmatprep.subr.mxu0 0.0
  %82 = vmatpush1.msra.mxu0 0.0
  %83 = vmatprep.subr.mxu0 0.0
  %84 = vmatpush1.msra.mxu0 0.0
  %85 = vmatprep.subr.mxu0 0.0
  %86 = vmatpush1.msra.mxu0 0.0
  %87 = vmatprep.subr.mxu0 0.0
  %88 = vmatpush1.msra.mxu0 0.0
  %89 = vmatprep.subr.mxu0 0.0
  %90 = vmatpush1.msra.mxu0 0.0
  %91 = vmatprep.subr.mxu0 0.0
  %92 = vmatpush1.msra.mxu0 0.0
  %93 = vmatprep.subr.mxu0 0.0
  %94 = vmatpush1.msra.mxu0 0.0
  %95 = vmatprep.subr.mxu0 0.0
  %96 = vmatpush1.msra.mxu0 0.0
  %97 = vmatprep.mubr.f32.mxu0 0.0
  %98 = vmatmul.mubr.f32.gmra.mrb[0].mxu0 %v31
  %v99 = vpop.f32.mrb[0].mxu0
  %v100 = vadd.f32 %v27, %v99
  %v101 = vpop.f32.mrb[0].mxu0
  %102 = vdwg.mxu0
  %v103 = vtanh.pop %v100
  %v104 = vld [vmem:[%s3] sm:$0xff]
  %v105 = vld [vmem:[%s3 + $0x8] sm:$0xff]
  %v106 = vld [vmem:[%s3 + $0x10] sm:$0xff]
  %v107 = vld [vmem:[%s3 + $0x18] sm:$0xff]
  %v108 = vld [vmem:[%s3 + $0x20] sm:$0xff]
  %v109 = vld [vmem:[%s3 + $0x28] sm:$0xff]
  %v110 = vld [vmem:[%s3 + $0x30] sm:$0xff]
  %v111 = vld [vmem:[%s3 + $0x38] sm:$0xff]
  %vm112 = vcmask 523264
  %v114 = vsel %vm112, %v103, 0
  %116 = vmatprep.subr.mxu0 0.0
  %117 = vmatpush1.msra.mxu0 %v104
  %118 = vmatprep.subr.mxu0 0.0
  %119 = vmatpush1.msra.mxu0 %v105
  %120 = vmatprep.subr.mxu0 0.0
  %121 = vmatpush1.msra.mxu0 %v106
  %122 = vmatprep.subr.mxu0 0.0
  %123 = vmatpush1.msra.mxu0 %v107
  %124 = vmatprep.subr.mxu0 0.0
  %125 = vmatpush1.msra.mxu0 %v108
  %126 = vmatprep.subr.mxu0 0.0
  %127 = vmatpush1.msra.mxu0 %v109
  %128 = vmatprep.subr.mxu0 0.0
  %129 = vmatpush1.msra.mxu0 %v110
  %130 = vmatprep.subr.mxu0 0.0
  %131 = vmatpush1.msra.mxu0 %v111
  %132 = vmatprep.subr.mxu0 0.0
  %133 = vmatpush1.msra.mxu0 0.0
  %134 = vmatprep.subr.mxu0 0.0
  %135 = vmatpush1.msra.mxu0 0.0
  %136 = vmatprep.subr.mxu0 0.0
  %137 = vmatpush1.msra.mxu0 0.0
  %138 = vmatprep.subr.mxu0 0.0
  %139 = vmatpush1.msra.mxu0 0.0
  %140 = vmatprep.subr.mxu0 0.0
  %141 = vmatpush1.msra.mxu0 0.0
  %142 = vmatprep.subr.mxu0 0.0
  %143 = vmatpush1.msra.mxu0 0.0
  %144 = vmatprep.subr.mxu0 0.0
  %145 = vmatpush1.msra.mxu0 0.0
  %146 = vmatprep.subr.mxu0 0.0
  %147 = vmatpush1.msra.mxu0 0.0
  %148 = vmatprep.subr.mxu0 0.0
  %149 = vmatpush1.msra.mxu0 0.0
  %150 = vmatprep.subr.mxu0 0.0
  %151 = vmatpush1.msra.mxu0 0.0
  %152 = vmatprep.subr.mxu0 0.0
  %153 = vmatpush1.msra.mxu0 0.0
  %154 = vmatprep.subr.mxu0 0.0
  %155 = vmatpush1.msra.mxu0 0.0
  %156 = vmatprep.subr.mxu0 0.0
  %157 = vmatpush1.msra.mxu0 0.0
  %158 = vmatprep.subr.mxu0 0.0
  %159 = vmatpush1.msra.mxu0 0.0
  %160 = vmatprep.subr.mxu0 0.0
  %161 = vmatpush1.msra.mxu0 0.0
  %162 = vmatprep.subr.mxu0 0.0
  %163 = vmatpush1.msra.mxu0 0.0
  %164 = vmatprep.subr.mxu0 0.0
  %165 = vmatpush1.msra.mxu0 0.0
  %166 = vmatprep.subr.mxu0 0.0
  %167 = vmatpush1.msra.mxu0 0.0
  %168 = vmatprep.subr.mxu0 0.0
  %169 = vmatpush1.msra.mxu0 0.0
  %170 = vmatprep.subr.mxu0 0.0
  %171 = vmatpush1.msra.mxu0 0.0
  %172 = vmatprep.subr.mxu0 0.0
  %173 = vmatpush1.msra.mxu0 0.0
  %174 = vmatprep.subr.mxu0 0.0
  %175 = vmatpush1.msra.mxu0 0.0
  %176 = vmatprep.subr.mxu0 0.0
  %177 = vmatpush1.msra.mxu0 0.0
  %178 = vmatprep.subr.mxu0 0.0
  %179 = vmatpush1.msra.mxu0 0.0
  %180 = vmatprep.mubr.f32.mxu0 0.0
  %181 = vmatmul.mubr.f32.gmra.mrb[0].mxu0 %v114
  %v182 = vpop.f32.mrb[0].mxu0
  %v183 = vadd.f32 0.0, %v182
  %v184 = vpop.f32.mrb[0].mxu0
  %185 = vdwg.mxu0
  %vm186 = vcmask 31744
  %187 = vst.msk [vmem:[%s4] sm:$0xff] %vm186, %v183
  // Predicated region
  $region18: #{tpu_custom_call.1} parent=0 // pred_check
    _
  $region19: #{tpu_custom_call.1} parent=0 // pred_check_branch
    %189 = sbr.rel (0) target = $region21
  $region20: #{tpu_custom_call.1} parent=0 // pred_region
    _
  $region21: #{tpu_custom_call.1} parent=0 // pred_fallthru
    _
  // Predicated region
  $region22: #{tpu_custom_call.1} parent=0 // pred_check
    _
  $region23: #{tpu_custom_call.1} parent=0 // pred_check_branch
    %191 = sbr.rel (0) target = $region25
  $region24: #{tpu_custom_call.1} parent=0 // pred_region
    _
  $region25: #{tpu_custom_call.1} parent=0 // pred_fallthru
    _

</llo_original>
